<compile_context>
chip_gen: v5e
topology: v5e:2x2
jax: 0.10.0
libtpu: 0.0.40
codegen_flags: <defaults>
</compile_context>

<pallas_src>
import jax
import jax.numpy as jnp
from jax.experimental import pallas as pl
from jax.experimental.pallas import tpu as pltpu


def _fbn_kernel(x_ref, scale_ref, shift_ref, o_ref):
    # scale/shift blocks are (BR, 1) or (1, BM) f32 -> VPU broadcast FMA.
    x32 = x_ref[...].astype(jnp.float32)
    o_ref[...] = (x32 * scale_ref[...] + shift_ref[...]).astype(o_ref.dtype)


def _per_chip_vmem_budget():
    """Returns (total VMEM byte budget for this kernel, optional vmem_limit_bytes)."""
    kind = ""
    try:
        kind = jax.devices()[0].device_kind.lower()
    except Exception:
        pass
    if "v7" in kind or "7x" in kind:
        # ~8 MiB input blocks -> ~32 MiB double-buffered in+out peak; raise the
        # scoped limit but stay well under v7x's 64 MiB physical VMEM.
        return 32 * 1024 * 1024, 48 * 1024 * 1024
    if "v6" in kind:
        return 16 * 1024 * 1024, None          # fits 32 MiB default scoped VMEM
    # v5e (16 MiB default scoped VMEM) and unknown chips: conservative 2 MiB blocks.
    return 8 * 1024 * 1024, None


def _pick_blocks(R, M, itemsize, per_row, budget):
    """Block sizes (BR, BM) whose double-buffered in+out (+ broadcast buffers)
    VMEM footprint stays within `budget`."""
    lane = 128
    sub = {4: 8, 2: 16, 1: 32}.get(itemsize, 8)   # sublane tile (bf16 -> 16 rows)
    if per_row:
        # scale/shift blocks are (BR, 1) f32, lane-padded to 128 lanes
        # -> 512 B/row each, two arrays double-buffered -> 2048 B per block row.
        bytes_per_full_row = 4 * M * itemsize + 2048
        br = budget // bytes_per_full_row
        if br >= sub:
            BM = M                                         # full rows, no column split
            BR = min(R, (br // sub) * sub)
        else:
            # Rows too fat for the budget -> take `sub` rows and split columns.
            BR = min(R, sub)
            bm_max = max(lane, (budget // max(BR, 1) - 2048) // (4 * itemsize))
            BM = min(M, (bm_max // lane) * lane)
    else:
        # scale/shift blocks are (1, BM) f32, sublane-padded to 8 rows
        # -> 32 B/col each, two arrays double-buffered -> 128 B per block column.
        bytes_per_full_col = 4 * R * itemsize + 128
        bm = budget // bytes_per_full_col
        if bm >= lane:
            BR = R
            BM = min(M, (bm // lane) * lane)
        else:
            BM = min(M, lane)
            br_max = max(sub, (budget // max(BM, 1) - 128) // (4 * itemsize))
            BR = min(R, (br_max // sub) * sub)
    return max(1, BR), max(1, BM)


def frozen_batch_norm_2d(x, weight, bias, running_mean, running_var,
                         eps=1e-5, donate=False):
    """Equivalent of FrozenBatchNorm2d.forward. x: (N, C, H, W), any float dtype."""
    x = jnp.asarray(x)
    in_dtype = x.dtype
    f32 = jnp.float32
    w = jnp.asarray(weight, f32)
    b = jnp.asarray(bias, f32)
    rm = jnp.asarray(running_mean, f32)
    rv = jnp.asarray(running_var, f32)

    N, C, H, W = x.shape

    # Per-channel affine (tiny, length-C math, done once outside the hot path).
    scale = w * jax.lax.rsqrt(rv + eps)           # (C,)
    shift = b - rm * scale                        # (C,)

    HW = H * W
    if HW >= 128:
        # Lane axis = spatial; per-row (= per (n, c)) scale/shift columns.
        per_row = True
        R, M = N * C, HW
        x2 = x.reshape(R, M)
        s2 = jnp.tile(scale, N).reshape(R, 1)     # row r -> channel r % C
        t2 = jnp.tile(shift, N).reshape(R, 1)
    elif C * HW >= 128:
        # Small spatial stage: lane axis = C*H*W so stores stay full-lane;
        # scale/shift are expanded along lanes instead of rows.
        per_row = False
        R, M = N, C * HW
        x2 = x.reshape(R, M)
        s2 = jnp.repeat(scale, HW).reshape(1, M)  # col -> channel col // HW
        t2 = jnp.repeat(shift, HW).reshape(1, M)
    else:
        # Degenerate tiny tensor: a Pallas launch is pure per-step overhead;
        # let XLA fuse the affine into the neighbouring ops.
        y = x.astype(f32) * scale.reshape(1, C, 1, 1) + shift.reshape(1, C, 1, 1)
        return y.astype(in_dtype)

    itemsize = jnp.dtype(in_dtype).itemsize
    budget, vmem_limit = _per_chip_vmem_budget()
    BR, BM = _pick_blocks(R, M, itemsize, per_row, budget)

    if per_row:
        bcast_spec = pl.BlockSpec((BR, 1), lambda i, j: (i, 0))
    else:
        bcast_spec = pl.BlockSpec((1, BM), lambda i, j: (0, j))

    grid = (pl.cdiv(R, BR), pl.cdiv(M, BM))

    cp = dict(dimension_semantics=("parallel", "parallel"))
    if vmem_limit is not None:
        cp["vmem_limit_bytes"] = vmem_limit

    call_kwargs = {}
    if donate:
        # x2 and out have identical shape/dtype; aliasing halves HBM footprint.
        call_kwargs["input_output_aliases"] = {0: 0}

    out = pl.pallas_call(
        _fbn_kernel,
        out_shape=jax.ShapeDtypeStruct((R, M), in_dtype),
        grid_spec=pltpu.PrefetchScalarGridSpec(
            num_scalar_prefetch=0,
            grid=grid,
            in_specs=[
                pl.BlockSpec((BR, BM), lambda i, j: (i, j)),   # x block
                bcast_spec,                                    # per-row/col scale
                bcast_spec,                                    # per-row/col shift
            ],
            out_specs=pl.BlockSpec((BR, BM), lambda i, j: (i, j)),
        ),
        compiler_params=pltpu.CompilerParams(**cp),
        **call_kwargs,
    )(x2, s2, t2)

    return out.reshape(N, C, H, W)


if __name__ == "__main__":
    key = jax.random.PRNGKey(0)
    kx, kw, kb, km, kv = jax.random.split(key, 5)

    N, C, H, W = 2, 4, 16, 16
    x = jax.random.normal(kx, (N, C, H, W), dtype=jnp.float32)
    weight = jax.random.normal(kw, (C,), dtype=jnp.float32)
    bias_p = jax.random.normal(kb, (C,), dtype=jnp.float32)
    running_mean = jax.random.normal(km, (C,), dtype=jnp.float32)
    running_var = jax.random.uniform(kv, (C,), dtype=jnp.float32,
                                     minval=0.5, maxval=2.0)

    # Reference: identical math to FrozenBatchNorm2d.forward.
    eps = 1e-5
    scale_ref = (weight * jax.lax.rsqrt(running_var + eps)).reshape(1, C, 1, 1)
    shift_ref = bias_p.reshape(1, C, 1, 1) - running_mean.reshape(1, C, 1, 1) * scale_ref

    # f32 path: matches the reference exactly, dtype preserved.
    y = jax.block_until_ready(
        frozen_batch_norm_2d(x, weight, bias_p, running_mean, running_var))
    y_ref = x * scale_ref + shift_ref
    assert y.shape == (N, C, H, W) and y.dtype == jnp.float32
    assert jnp.allclose(y, y_ref, atol=1e-5, rtol=1e-5)

    # bf16 path: I/O stays bf16 (half the HBM traffic), math in f32 in-register.
    x_bf16 = x.astype(jnp.bfloat16)
    y_bf16 = jax.block_until_ready(
        frozen_batch_norm_2d(x_bf16, weight, bias_p, running_mean, running_var))
    y_bf16_ref = x_bf16.astype(jnp.float32) * scale_ref + shift_ref
    assert y_bf16.shape == (N, C, H, W) and y_bf16.dtype == jnp.bfloat16
    assert jnp.allclose(y_bf16.astype(jnp.float32), y_bf16_ref, atol=5e-2, rtol=5e-2)

    print("KERNEL_OK")
</pallas_src>

<mosaic_0001>
module attributes {stable_mosaic.version = 11 : i64} {
  func.func @_fbn_kernel(%arg0: i32, %arg1: i32, %arg2: memref<8x256xf32, #tpu.memory_space<vmem>>, %arg3: memref<8x1xf32, #tpu.memory_space<vmem>>, %arg4: memref<8x1xf32, #tpu.memory_space<vmem>>, %arg5: memref<8x256xf32, #tpu.memory_space<vmem>>) attributes {dimension_semantics = [#tpu.dimension_semantics<parallel>, #tpu.dimension_semantics<parallel>], iteration_bounds = array<i64: 1, 1>, scalar_prefetch = 0 : i64, scratch_operands = 0 : i64, tpu.core_type = #tpu.core_type<tc>, window_params = [{transform_indices = @transform_0, window_bounds = array<i64: 8, 256>}, {transform_indices = @transform_1, window_bounds = array<i64: 8, 1>}, {transform_indices = @transform_2, window_bounds = array<i64: 8, 1>}, {transform_indices = @transform_3, window_bounds = array<i64: 8, 256>}]} {
    %c0 = arith.constant 0 : index
    %c0_0 = arith.constant 0 : index
    %0 = vector.load %arg2[%c0, %c0_0] : memref<8x256xf32, #tpu.memory_space<vmem>>, vector<8x256xf32>
    %c0_1 = arith.constant 0 : index
    %c0_2 = arith.constant 0 : index
    %1 = vector.load %arg3[%c0_1, %c0_2] : memref<8x1xf32, #tpu.memory_space<vmem>>, vector<8x1xf32>
    %2 = vector.broadcast %1 : vector<8x1xf32> to vector<8x256xf32>
    %3 = arith.mulf %0, %2 : vector<8x256xf32>
    %c0_3 = arith.constant 0 : index
    %c0_4 = arith.constant 0 : index
    %4 = vector.load %arg4[%c0_3, %c0_4] : memref<8x1xf32, #tpu.memory_space<vmem>>, vector<8x1xf32>
    %5 = vector.broadcast %4 : vector<8x1xf32> to vector<8x256xf32>
    %6 = arith.addf %3, %5 : vector<8x256xf32>
    %c0_5 = arith.constant 0 : index
    %c0_6 = arith.constant 0 : index
    %7 = vector.load %arg5[%c0_5, %c0_6] : memref<8x256xf32, #tpu.memory_space<vmem>>, vector<8x256xf32>
    tpu.vector_store %arg5[%c0_5, %c0_6], %6 {strides = array<i32>} : memref<8x256xf32, #tpu.memory_space<vmem>>, vector<8x256xf32>,
    return
  }
  func.func @transform_0(%arg0: i32, %arg1: i32) -> (i32, i32) {
    %c0_i32 = arith.constant 0 : i32
    return %arg0, %arg1 : i32, i32
  }
  func.func @transform_1(%arg0: i32, %arg1: i32) -> (i32, i32) {
    %c0_i32 = arith.constant 0 : i32
    %c0_i32_0 = arith.constant 0 : i32
    return %arg0, %c0_i32 : i32, i32
  }
  func.func @transform_2(%arg0: i32, %arg1: i32) -> (i32, i32) {
    %c0_i32 = arith.constant 0 : i32
    %c0_i32_0 = arith.constant 0 : i32
    return %arg0, %c0_i32 : i32, i32
  }
  func.func @transform_3(%arg0: i32, %arg1: i32) -> (i32, i32) {
    %c0_i32 = arith.constant 0 : i32
    return %arg0, %arg1 : i32, i32
  }
}

</mosaic_0001>

<llo_original>
// kernel: tpu_custom_call.1
$region0: #{tpu_custom_call.1}
  #allocation0 [shape = 'u32[]', space=smem, size = 0x4, offset = 0x4, fixed_abs, tag = 'smem constant byte address 0x4 - core index']
  #allocation1 [shape = 'u32[72,128]{1,0:T(1,128)}', space=vmem, size = 0x9000, scoped, tag = 'internal scratch']
  %s0 = inlined_call_operand.vmem [shape: f32[8,256], index: 0, kind: input, shape index: {}]
  %s1 = inlined_call_operand.vmem [shape: f32[8,1], index: 1, kind: input, shape index: {}]
  %s2 = inlined_call_operand.vmem [shape: f32[8,1], index: 2, kind: input, shape index: {}]
  %s3 = inlined_call_operand.hbm [shape: f32[8,256], index: 3, kind: output, shape index: {}]
  %s4 = sld [smem:[#allocation0]]
  $region22: #{tpu_custom_call.1} parent=0
    _
  %s6 = ssub.s32 1, %s4
  %s7 = scalar_select 0, %s6, %s4
  $region1: #{tpu_custom_call.1} parent=0
    #allocation2 [shape = 'u8[8192]{0}', space=vmem, size = 0x2000, scoped, tag = 'output window, operand 0, single buffered']
    #allocation3 [shape = 's32[1]{0}', space=sflag, size = 0x4, scoped, tag = 'scoped memory for tpu_custom_call.1']
    %8 = vsyncpa [#allocation3], 0
    // Predicated region
    $region2: #{tpu_custom_call.1} parent=1 // pred_check
      _
    $region3: #{tpu_custom_call.1} parent=1 // pred_check_branch
      %10 = sbr.rel (0) target = $region5
    $region4: #{tpu_custom_call.1} parent=1 // pred_region
      _
    $region5: #{tpu_custom_call.1} parent=1 // pred_fallthru
      _
    // Predicated region
    $region6: #{tpu_custom_call.1} parent=1 // pred_check
      _
    $region7: #{tpu_custom_call.1} parent=1 // pred_check_branch
      %12 = sbr.rel (0) target = $region9
    $region8: #{tpu_custom_call.1} parent=1 // pred_region
      _
    $region9: #{tpu_custom_call.1} parent=1 // pred_fallthru
      _
    // Predicated region
    $region10: #{tpu_custom_call.1} parent=1 // pred_check
      _
    $region11: #{tpu_custom_call.1} parent=1 // pred_check_branch
      %14 = sbr.rel (0) target = $region13
    $region12: #{tpu_custom_call.1} parent=1 // pred_region
      _
    $region13: #{tpu_custom_call.1} parent=1 // pred_fallthru
      _
    %v15 = vld [vmem:[%s0] sm:$0xff]
    %v16 = vld [vmem:[%s0 + $0x8] sm:$0xff]
    %v17 = vld [vmem:[%s1] sm:$0xff]
    %19 = vset.pattern.permute.xlu0 0
    %20 = vperm.xlu0 %19, %v17
    %v21 = vpop.permute.xlu0 %20
    %v23 = vmul.f32 %v15, %v21
    %v24 = vmul.f32 %v16, %v21
    %v25 = vld [vmem:[%s2] sm:$0xff]
    %27 = vset.pattern.permute.xlu0 0
    %28 = vperm.xlu0 %27, %v25
    %v29 = vpop.permute.xlu0 %28
    %v31 = vadd.f32 %v23, %v29
    %v32 = vadd.f32 %v24, %v29
    %33 = vst [vmem:[#allocation2] sm:$0xff] %v31
    %34 = vst [vmem:[#allocation2 + $0x8] sm:$0xff] %v32
    // Predicated region
    $region14: #{tpu_custom_call.1} parent=1 // pred_check
      _
    $region15: #{tpu_custom_call.1} parent=1 // pred_check_branch
      %36 = sbr.rel (0) target = $region17
    $region16: #{tpu_custom_call.1} parent=1 // pred_region
      %38 = vsyncadd [#allocation3], 0
      %s40 = sshll.u32 [#allocation2], 4
      %s41 = int_to_ptr.vmem [resolvable:$true] %s40
      %s42 = sshll.u32 %s3, 4
      %s43 = int_to_ptr.hbm [resolvable:$true] %s42
      %45 = dma.vmem_to_hbm [thread:$0]  %s41, 256, %s43, [#allocation3]
    $region17: #{tpu_custom_call.1} parent=1 // pred_fallthru
      _
    // Predicated region
    $region18: #{tpu_custom_call.1} parent=1 // pred_check
      _
    $region19: #{tpu_custom_call.1} parent=1 // pred_check_branch
      %47 = sbr.rel (0) target = $region21
    $region20: #{tpu_custom_call.1} parent=1 // pred_region
      %49 = dma.done [#allocation3], 256
    $region21: #{tpu_custom_call.1} parent=1 // pred_fallthru
      _
    %50 = vsyncpa [#allocation3], 1

</llo_original>
